<compile_context>
chip_gen: v5e
topology: v5e:2x2
jax: 0.10.0
libtpu: 0.0.40
codegen_flags: <defaults>
</compile_context>

<pallas_src>
import functools

import jax
import jax.numpy as jnp
from jax import lax
from jax.experimental import pallas as pl
from jax.experimental.pallas import tpu as pltpu


def _pick_row_tile(Ho, Wo):
    """Output-row tile TH: divides Ho, keeps TH*Wo a multiple of 128 (lane-dense
    unmasked output stores); prefer >= 8 rows/step, else fall back to the full
    height (a block equal to the full dim is always legal)."""
    cands = [t for t in range(1, Ho + 1)
             if Ho % t == 0 and ((t * Wo) % 128 == 0 or t == Ho)]
    for t in cands:
        if t >= 8:
            return t
    return cands[-1]


def _conv_depthwise_kernel(x_ref, wdw_ref, wpw_ref, b1_ref, b2_ref, o_ref, *,
                           TH, Wo, stride):
    """One (batch element, output-row tile) per grid step.

    x_ref  : (1, Hp, Wp, Cin)   padded NHWC input (whole image, resident per n)
    wdw_ref: (9, Cin)   f32     depthwise 3x3 weights * BN1 scale, row = kh*3+kw
    wpw_ref: (Cout, Cin) bf16   pointwise weights * BN2 scale (per out channel)
    b1_ref : (1, Cin)   f32     folded BN1 shift
    b2_ref : (Cout, 1)  f32     folded BN2 shift
    o_ref  : (1, Cout, TH*Wo)   channel-major, lane-dense output tile
    """
    h0 = pl.multiple_of(pl.program_id(1) * TH, TH)   # first output row of tile

    # ---- depthwise 3x3 conv (BN1 scale already folded into the weights) ----
    acc = None
    for kh in range(3):                              # static 3x3 unroll
        for kw in range(3):
            if stride == 1:
                patch = x_ref[0, pl.ds(h0 + kh, TH), pl.ds(kw, Wo), :]
            else:
                # strided Ref read: fetch only the taps actually used
                patch = x_ref[0, pl.ds(h0 * stride + kh, TH, stride),
                              pl.ds(kw, Wo, stride), :]
            tap = patch.astype(jnp.float32) * wdw_ref[kh * 3 + kw, :]
            acc = tap if acc is None else acc + tap   # (TH, Wo, Cin)

    # ---- BN1 shift + ReLU ----
    y = jnp.maximum(acc + b1_ref[0], 0.0)             # (TH, Wo, Cin)

    # ---- pointwise 1x1 conv on the MXU (bf16 in, f32 acc), channel-major ----
    y2d = y.reshape(TH * Wo, Cin_from(y)).astype(jnp.bfloat16) if False else \
        y.reshape(TH * Wo, y.shape[-1]).astype(jnp.bfloat16)
    z = lax.dot_general(wpw_ref[...], y2d,
                        dimension_numbers=(((1,), (1,)), ((), ())),
                        preferred_element_type=jnp.float32)   # (Cout, TH*Wo)

    # ---- BN2 shift + ReLU, lane-dense store ----
    o_ref[0] = jnp.maximum(z + b2_ref[...], 0.0).astype(o_ref.dtype)


def Cin_from(_):  # placeholder never used (kept trivial to avoid dead-code lint)
    return 0


def conv_depth_wise(x_nchw, params, *, stride, eps=1e-5):
    """Forward pass of ConvDepthWise. Input/output are NCHW (PyTorch layout)."""
    N, Cin, H, W = x_nchw.shape
    Cout = params["w_pw"].shape[0]
    Ho = (H + 2 - 3) // stride + 1
    Wo = (W + 2 - 3) // stride + 1
    Hp, Wp = H + 2, W + 2

    # ---- fold eval-mode BN into the conv weights (scales) + shifts ----
    s1 = params["g1"] / jnp.sqrt(params["v1"] + eps)            # (Cin,)
    b1 = (params["bt1"] - params["m1"] * s1).reshape(1, Cin)
    s2 = params["g2"] / jnp.sqrt(params["v2"] + eps)            # (Cout,)
    b2 = (params["bt2"] - params["m2"] * s2).reshape(Cout, 1)

    # depthwise (Cin,1,3,3) -> (9, Cin), scaled by s1 (f32 for the VPU path)
    w_dw_k = (jnp.transpose(params["w_dw"][:, 0, :, :], (1, 2, 0))
              .reshape(9, Cin) * s1[None, :]).astype(jnp.float32)
    # pointwise (Cout,Cin,1,1) -> (Cout, Cin), scaled per output channel,
    # cast to bf16 once in the wrapper for the MXU.
    w_pw_k = (params["w_pw"][:, :, 0, 0] * s2[:, None]).astype(jnp.bfloat16)

    # NCHW -> NHWC (channels on lanes), zero-pad spatial by 1 (conv padding=1).
    x_nhwc = jnp.transpose(x_nchw, (0, 2, 3, 1))
    xp = jnp.pad(x_nhwc, ((0, 0), (1, 1), (1, 1), (0, 0)))

    TH = _pick_row_tile(Ho, Wo)
    n_h = Ho // TH

    kernel = functools.partial(_conv_depthwise_kernel, TH=TH, Wo=Wo,
                               stride=stride)

    out = pl.pallas_call(
        kernel,
        out_shape=jax.ShapeDtypeStruct((N, Cout, Ho * Wo), x_nchw.dtype),
        grid_spec=pltpu.PrefetchScalarGridSpec(
            num_scalar_prefetch=0,
            grid=(N, n_h),                       # h innermost -> input block reused
            in_specs=[
                pl.BlockSpec((1, Hp, Wp, Cin), lambda n, h: (n, 0, 0, 0)),
                pl.BlockSpec((9, Cin), lambda n, h: (0, 0)),
                pl.BlockSpec((Cout, Cin), lambda n, h: (0, 0)),
                pl.BlockSpec((1, Cin), lambda n, h: (0, 0)),
                pl.BlockSpec((Cout, 1), lambda n, h: (0, 0)),
            ],
            out_specs=pl.BlockSpec((1, Cout, TH * Wo), lambda n, h: (n, 0, h)),
        ),
        compiler_params=pltpu.CompilerParams(
            dimension_semantics=("parallel", "parallel")),
    )(xp, w_dw_k, w_pw_k, b1, b2)

    # Output is already channel-major: just reshape to NCHW (no HBM transpose).
    return out.reshape(N, Cout, Ho, Wo)


def _reference(x_nchw, params, *, stride, eps=1e-5):
    """Pure-JAX (XLA conv) reference, NCHW / PyTorch semantics, eval-mode BN."""
    Cin = x_nchw.shape[1]
    y = lax.conv_general_dilated(
        x_nchw, params["w_dw"], window_strides=(stride, stride),
        padding=((1, 1), (1, 1)),
        dimension_numbers=("NCHW", "OIHW", "NCHW"),
        feature_group_count=Cin)
    s1 = params["g1"] / jnp.sqrt(params["v1"] + eps)
    b1 = params["bt1"] - params["m1"] * s1
    y = jnp.maximum(y * s1[None, :, None, None] + b1[None, :, None, None], 0.0)
    z = lax.conv_general_dilated(
        y, params["w_pw"], window_strides=(1, 1), padding="VALID",
        dimension_numbers=("NCHW", "OIHW", "NCHW"))
    s2 = params["g2"] / jnp.sqrt(params["v2"] + eps)
    b2 = params["bt2"] - params["m2"] * s2
    return jnp.maximum(z * s2[None, :, None, None] + b2[None, :, None, None], 0.0)


if __name__ == "__main__":
    key = jax.random.PRNGKey(0)
    N, Cin, H, W = 2, 4, 16, 16
    Cout = 8
    stride = 1  # stride handled generically by the kernel; demo at 1

    ks = jax.random.split(key, 11)
    x = jax.random.normal(ks[0], (N, Cin, H, W), jnp.float32)
    params = {
        # conv weights (PyTorch shapes)
        "w_dw": jax.random.normal(ks[1], (Cin, 1, 3, 3), jnp.float32) * 0.5,
        "w_pw": jax.random.normal(ks[2], (Cout, Cin, 1, 1), jnp.float32) * 0.5,
        # BatchNorm1 (gamma, beta, running_mean, running_var)
        "g1": jax.random.uniform(ks[3], (Cin,), minval=0.5, maxval=1.5),
        "bt1": jax.random.normal(ks[4], (Cin,)) * 0.1,
        "m1": jax.random.normal(ks[5], (Cin,)) * 0.1,
        "v1": jax.random.uniform(ks[6], (Cin,), minval=0.5, maxval=1.5),
        # BatchNorm2
        "g2": jax.random.uniform(ks[7], (Cout,), minval=0.5, maxval=1.5),
        "bt2": jax.random.normal(ks[8], (Cout,)) * 0.1,
        "m2": jax.random.normal(ks[9], (Cout,)) * 0.1,
        "v2": jax.random.uniform(ks[10], (Cout,), minval=0.5, maxval=1.5),
    }

    out = conv_depth_wise(x, params, stride=stride)
    out = jax.block_until_ready(out)

    ref = jax.block_until_ready(_reference(x, params, stride=stride))
    assert out.shape == ref.shape, (out.shape, ref.shape)
    # Pointwise matmul uses bf16 MXU operands (f32 accumulation) -> looser tol.
    assert jnp.allclose(out, ref, atol=3e-2, rtol=3e-2), "mismatch vs reference"

    print("KERNEL_OK")
</pallas_src>

<mosaic_0001>
module attributes {stable_mosaic.version = 11 : i64} {
  func.func @_conv_depthwise_kernel(%arg0: i32, %arg1: i32, %arg2: memref<1x18x18x4xf32, #tpu.memory_space<vmem>>, %arg3: memref<9x4xf32, #tpu.memory_space<vmem>>, %arg4: memref<8x4xbf16, #tpu.memory_space<vmem>>, %arg5: memref<1x4xf32, #tpu.memory_space<vmem>>, %arg6: memref<8x1xf32, #tpu.memory_space<vmem>>, %arg7: memref<1x8x128xf32, #tpu.memory_space<vmem>>) attributes {dimension_semantics = [#tpu.dimension_semantics<parallel>, #tpu.dimension_semantics<parallel>], iteration_bounds = array<i64: 2, 2>, scalar_prefetch = 0 : i64, scratch_operands = 0 : i64, tpu.core_type = #tpu.core_type<tc>, window_params = [{transform_indices = @transform_0, window_bounds = array<i64: 1, 18, 18, 4>}, {pipeline_mode = #tpu.pipeline_mode<synchronous>, transform_indices = @transform_1, window_bounds = array<i64: 9, 4>}, {pipeline_mode = #tpu.pipeline_mode<synchronous>, transform_indices = @transform_2, window_bounds = array<i64: 8, 4>}, {pipeline_mode = #tpu.pipeline_mode<synchronous>, transform_indices = @transform_3, window_bounds = array<i64: 1, 4>}, {pipeline_mode = #tpu.pipeline_mode<synchronous>, transform_indices = @transform_4, window_bounds = array<i64: 8, 1>}, {transform_indices = @transform_5, window_bounds = array<i64: 1, 8, 128>}]} {
    %c8_i32 = arith.constant 8 : i32
    %0 = arith.muli %arg1, %c8_i32 : i32
    %1 = tpu.assume_multiple %0, 8 : i32
    %c0_i32 = arith.constant 0 : i32
    %2 = arith.addi %1, %c0_i32 : i32
    %c0 = arith.constant 0 : index
    %3 = arith.index_cast %2 : i32 to index
    %c0_0 = arith.constant 0 : index
    %c0_1 = arith.constant 0 : index
    %4 = vector.load %arg2[%c0, %3, %c0_0, %c0_1] : memref<1x18x18x4xf32, #tpu.memory_space<vmem>>, vector<1x8x16x4xf32>
    %5 = vector.shape_cast %4 : vector<1x8x16x4xf32> to vector<8x16x4xf32>
    %c0_2 = arith.constant 0 : index
    %c0_3 = arith.constant 0 : index
    %6 = vector.load %arg3[%c0_2, %c0_3] : memref<9x4xf32, #tpu.memory_space<vmem>>, vector<1x4xf32>
    %7 = vector.shape_cast %6 : vector<1x4xf32> to vector<4xf32>
    %8 = vector.shape_cast %7 : vector<4xf32> to vector<1x1x4xf32>
    %9 = vector.broadcast %8 : vector<1x1x4xf32> to vector<8x16x4xf32>
    %10 = arith.mulf %5, %9 : vector<8x16x4xf32>
    %c0_i32_4 = arith.constant 0 : i32
    %11 = arith.addi %1, %c0_i32_4 : i32
    %c0_5 = arith.constant 0 : index
    %12 = arith.index_cast %11 : i32 to index
    %c1 = arith.constant 1 : index
    %c0_6 = arith.constant 0 : index
    %13 = vector.load %arg2[%c0_5, %12, %c1, %c0_6] : memref<1x18x18x4xf32, #tpu.memory_space<vmem>>, vector<1x8x16x4xf32>
    %14 = vector.shape_cast %13 : vector<1x8x16x4xf32> to vector<8x16x4xf32>
    %c1_7 = arith.constant 1 : index
    %c0_8 = arith.constant 0 : index
    %15 = vector.load %arg3[%c1_7, %c0_8] : memref<9x4xf32, #tpu.memory_space<vmem>>, vector<1x4xf32>
    %16 = vector.shape_cast %15 : vector<1x4xf32> to vector<4xf32>
    %17 = vector.shape_cast %16 : vector<4xf32> to vector<1x1x4xf32>
    %18 = vector.broadcast %17 : vector<1x1x4xf32> to vector<8x16x4xf32>
    %19 = arith.mulf %14, %18 : vector<8x16x4xf32>
    %20 = arith.addf %10, %19 : vector<8x16x4xf32>
    %c0_i32_9 = arith.constant 0 : i32
    %21 = arith.addi %1, %c0_i32_9 : i32
    %c0_10 = arith.constant 0 : index
    %22 = arith.index_cast %21 : i32 to index
    %c2 = arith.constant 2 : index
    %c0_11 = arith.constant 0 : index
    %23 = vector.load %arg2[%c0_10, %22, %c2, %c0_11] : memref<1x18x18x4xf32, #tpu.memory_space<vmem>>, vector<1x8x16x4xf32>
    %24 = vector.shape_cast %23 : vector<1x8x16x4xf32> to vector<8x16x4xf32>
    %c2_12 = arith.constant 2 : index
    %c0_13 = arith.constant 0 : index
    %25 = vector.load %arg3[%c2_12, %c0_13] : memref<9x4xf32, #tpu.memory_space<vmem>>, vector<1x4xf32>
    %26 = vector.shape_cast %25 : vector<1x4xf32> to vector<4xf32>
    %27 = vector.shape_cast %26 : vector<4xf32> to vector<1x1x4xf32>
    %28 = vector.broadcast %27 : vector<1x1x4xf32> to vector<8x16x4xf32>
    %29 = arith.mulf %24, %28 : vector<8x16x4xf32>
    %30 = arith.addf %20, %29 : vector<8x16x4xf32>
    %c1_i32 = arith.constant 1 : i32
    %31 = arith.addi %1, %c1_i32 : i32
    %c0_14 = arith.constant 0 : index
    %32 = arith.index_cast %31 : i32 to index
    %c0_15 = arith.constant 0 : index
    %c0_16 = arith.constant 0 : index
    %33 = vector.load %arg2[%c0_14, %32, %c0_15, %c0_16] : memref<1x18x18x4xf32, #tpu.memory_space<vmem>>, vector<1x8x16x4xf32>
    %34 = vector.shape_cast %33 : vector<1x8x16x4xf32> to vector<8x16x4xf32>
    %c3 = arith.constant 3 : index
    %c0_17 = arith.constant 0 : index
    %35 = vector.load %arg3[%c3, %c0_17] : memref<9x4xf32, #tpu.memory_space<vmem>>, vector<1x4xf32>
    %36 = vector.shape_cast %35 : vector<1x4xf32> to vector<4xf32>
    %37 = vector.shape_cast %36 : vector<4xf32> to vector<1x1x4xf32>
    %38 = vector.broadcast %37 : vector<1x1x4xf32> to vector<8x16x4xf32>
    %39 = arith.mulf %34, %38 : vector<8x16x4xf32>
    %40 = arith.addf %30, %39 : vector<8x16x4xf32>
    %c1_i32_18 = arith.constant 1 : i32
    %41 = arith.addi %1, %c1_i32_18 : i32
    %c0_19 = arith.constant 0 : index
    %42 = arith.index_cast %41 : i32 to index
    %c1_20 = arith.constant 1 : index
    %c0_21 = arith.constant 0 : index
    %43 = vector.load %arg2[%c0_19, %42, %c1_20, %c0_21] : memref<1x18x18x4xf32, #tpu.memory_space<vmem>>, vector<1x8x16x4xf32>
    %44 = vector.shape_cast %43 : vector<1x8x16x4xf32> to vector<8x16x4xf32>
    %c4 = arith.constant 4 : index
    %c0_22 = arith.constant 0 : index
    %45 = vector.load %arg3[%c4, %c0_22] : memref<9x4xf32, #tpu.memory_space<vmem>>, vector<1x4xf32>
    %46 = vector.shape_cast %45 : vector<1x4xf32> to vector<4xf32>
    %47 = vector.shape_cast %46 : vector<4xf32> to vector<1x1x4xf32>
    %48 = vector.broadcast %47 : vector<1x1x4xf32> to vector<8x16x4xf32>
    %49 = arith.mulf %44, %48 : vector<8x16x4xf32>
    %50 = arith.addf %40, %49 : vector<8x16x4xf32>
    %c1_i32_23 = arith.constant 1 : i32
    %51 = arith.addi %1, %c1_i32_23 : i32
    %c0_24 = arith.constant 0 : index
    %52 = arith.index_cast %51 : i32 to index
    %c2_25 = arith.constant 2 : index
    %c0_26 = arith.constant 0 : index
    %53 = vector.load %arg2[%c0_24, %52, %c2_25, %c0_26] : memref<1x18x18x4xf32, #tpu.memory_space<vmem>>, vector<1x8x16x4xf32>
    %54 = vector.shape_cast %53 : vector<1x8x16x4xf32> to vector<8x16x4xf32>
    %c5 = arith.constant 5 : index
    %c0_27 = arith.constant 0 : index
    %55 = vector.load %arg3[%c5, %c0_27] : memref<9x4xf32, #tpu.memory_space<vmem>>, vector<1x4xf32>
    %56 = vector.shape_cast %55 : vector<1x4xf32> to vector<4xf32>
    %57 = vector.shape_cast %56 : vector<4xf32> to vector<1x1x4xf32>
    %58 = vector.broadcast %57 : vector<1x1x4xf32> to vector<8x16x4xf32>
    %59 = arith.mulf %54, %58 : vector<8x16x4xf32>
    %60 = arith.addf %50, %59 : vector<8x16x4xf32>
    %c2_i32 = arith.constant 2 : i32
    %61 = arith.addi %1, %c2_i32 : i32
    %c0_28 = arith.constant 0 : index
    %62 = arith.index_cast %61 : i32 to index
    %c0_29 = arith.constant 0 : index
    %c0_30 = arith.constant 0 : index
    %63 = vector.load %arg2[%c0_28, %62, %c0_29, %c0_30] : memref<1x18x18x4xf32, #tpu.memory_space<vmem>>, vector<1x8x16x4xf32>
    %64 = vector.shape_cast %63 : vector<1x8x16x4xf32> to vector<8x16x4xf32>
    %c6 = arith.constant 6 : index
    %c0_31 = arith.constant 0 : index
    %65 = vector.load %arg3[%c6, %c0_31] : memref<9x4xf32, #tpu.memory_space<vmem>>, vector<1x4xf32>
    %66 = vector.shape_cast %65 : vector<1x4xf32> to vector<4xf32>
    %67 = vector.shape_cast %66 : vector<4xf32> to vector<1x1x4xf32>
    %68 = vector.broadcast %67 : vector<1x1x4xf32> to vector<8x16x4xf32>
    %69 = arith.mulf %64, %68 : vector<8x16x4xf32>
    %70 = arith.addf %60, %69 : vector<8x16x4xf32>
    %c2_i32_32 = arith.constant 2 : i32
    %71 = arith.addi %1, %c2_i32_32 : i32
    %c0_33 = arith.constant 0 : index
    %72 = arith.index_cast %71 : i32 to index
    %c1_34 = arith.constant 1 : index
    %c0_35 = arith.constant 0 : index
    %73 = vector.load %arg2[%c0_33, %72, %c1_34, %c0_35] : memref<1x18x18x4xf32, #tpu.memory_space<vmem>>, vector<1x8x16x4xf32>
    %74 = vector.shape_cast %73 : vector<1x8x16x4xf32> to vector<8x16x4xf32>
    %c7 = arith.constant 7 : index
    %c0_36 = arith.constant 0 : index
    %75 = vector.load %arg3[%c7, %c0_36] : memref<9x4xf32, #tpu.memory_space<vmem>>, vector<1x4xf32>
    %76 = vector.shape_cast %75 : vector<1x4xf32> to vector<4xf32>
    %77 = vector.shape_cast %76 : vector<4xf32> to vector<1x1x4xf32>
    %78 = vector.broadcast %77 : vector<1x1x4xf32> to vector<8x16x4xf32>
    %79 = arith.mulf %74, %78 : vector<8x16x4xf32>
    %80 = arith.addf %70, %79 : vector<8x16x4xf32>
    %c2_i32_37 = arith.constant 2 : i32
    %81 = arith.addi %1, %c2_i32_37 : i32
    %c0_38 = arith.constant 0 : index
    %82 = arith.index_cast %81 : i32 to index
    %c2_39 = arith.constant 2 : index
    %c0_40 = arith.constant 0 : index
    %83 = vector.load %arg2[%c0_38, %82, %c2_39, %c0_40] : memref<1x18x18x4xf32, #tpu.memory_space<vmem>>, vector<1x8x16x4xf32>
    %84 = vector.shape_cast %83 : vector<1x8x16x4xf32> to vector<8x16x4xf32>
    %c8 = arith.constant 8 : index
    %c0_41 = arith.constant 0 : index
    %85 = vector.load %arg3[%c8, %c0_41] : memref<9x4xf32, #tpu.memory_space<vmem>>, vector<1x4xf32>
    %86 = vector.shape_cast %85 : vector<1x4xf32> to vector<4xf32>
    %87 = vector.shape_cast %86 : vector<4xf32> to vector<1x1x4xf32>
    %88 = vector.broadcast %87 : vector<1x1x4xf32> to vector<8x16x4xf32>
    %89 = arith.mulf %84, %88 : vector<8x16x4xf32>
    %90 = arith.addf %80, %89 : vector<8x16x4xf32>
    %c0_42 = arith.constant 0 : index
    %c0_43 = arith.constant 0 : index
    %91 = vector.load %arg5[%c0_42, %c0_43] : memref<1x4xf32, #tpu.memory_space<vmem>>, vector<1x4xf32>
    %92 = vector.shape_cast %91 : vector<1x4xf32> to vector<4xf32>
    %93 = vector.shape_cast %92 : vector<4xf32> to vector<1x1x4xf32>
    %94 = vector.broadcast %93 : vector<1x1x4xf32> to vector<8x16x4xf32>
    %95 = arith.addf %90, %94 : vector<8x16x4xf32>
    %cst = arith.constant 0.000000e+00 : f32
    %96 = vector.broadcast %cst : f32 to vector<8x16x4xf32>
    %97 = arith.maximumf %95, %96 : vector<8x16x4xf32>
    %98 = vector.shape_cast %97 : vector<8x16x4xf32> to vector<128x4xf32>
    %99 = arith.truncf %98 : vector<128x4xf32> to vector<128x4xbf16>
    %c0_44 = arith.constant 0 : index
    %c0_45 = arith.constant 0 : index
    %100 = vector.load %arg4[%c0_44, %c0_45] : memref<8x4xbf16, #tpu.memory_space<vmem>>, vector<8x4xbf16>
    %cst_46 = arith.constant dense<0.000000e+00> : vector<8x128xf32>
    %101 = tpu.matmul %100, %99, %cst_46 {dimension_numbers = #tpu.dot_dimension_numbers<[1], [1], [0], [0], [0, 0, 1, 0], [], []>} : vector<8x4xbf16>, vector<128x4xbf16>, vector<8x128xf32> -> vector<8x128xf32>
    %c0_47 = arith.constant 0 : index
    %c0_48 = arith.constant 0 : index
    %102 = vector.load %arg6[%c0_47, %c0_48] : memref<8x1xf32, #tpu.memory_space<vmem>>, vector<8x1xf32>
    %103 = vector.broadcast %102 : vector<8x1xf32> to vector<8x128xf32>
    %104 = arith.addf %101, %103 : vector<8x128xf32>
    %cst_49 = arith.constant 0.000000e+00 : f32
    %105 = vector.broadcast %cst_49 : f32 to vector<8x128xf32>
    %106 = arith.maximumf %104, %105 : vector<8x128xf32>
    %c0_50 = arith.constant 0 : index
    %c0_51 = arith.constant 0 : index
    %c0_52 = arith.constant 0 : index
    %107 = vector.load %arg7[%c0_50, %c0_51, %c0_52] : memref<1x8x128xf32, #tpu.memory_space<vmem>>, vector<1x8x128xf32>
    %108 = vector.shape_cast %107 : vector<1x8x128xf32> to vector<8x128xf32>
    %109 = vector.shape_cast %106 : vector<8x128xf32> to vector<1x8x128xf32>
    tpu.vector_store %arg7[%c0_50, %c0_51, %c0_52], %109 {strides = array<i32>} : memref<1x8x128xf32, #tpu.memory_space<vmem>>, vector<1x8x128xf32>,
    return
  }
  func.func @transform_0(%arg0: i32, %arg1: i32) -> (i32, i32, i32, i32) {
    %c0_i32 = arith.constant 0 : i32
    %c0_i32_0 = arith.constant 0 : i32
    %c0_i32_1 = arith.constant 0 : i32
    %c0_i32_2 = arith.constant 0 : i32
    return %arg0, %c0_i32, %c0_i32_0, %c0_i32_1 : i32, i32, i32, i32
  }
  func.func @transform_1(%arg0: i32, %arg1: i32) -> (i32, i32) {
    %c0_i32 = arith.constant 0 : i32
    %c0_i32_0 = arith.constant 0 : i32
    %c0_i32_1 = arith.constant 0 : i32
    return %c0_i32, %c0_i32_0 : i32, i32
  }
  func.func @transform_2(%arg0: i32, %arg1: i32) -> (i32, i32) {
    %c0_i32 = arith.constant 0 : i32
    %c0_i32_0 = arith.constant 0 : i32
    %c0_i32_1 = arith.constant 0 : i32
    return %c0_i32, %c0_i32_0 : i32, i32
  }
  func.func @transform_3(%arg0: i32, %arg1: i32) -> (i32, i32) {
    %c0_i32 = arith.constant 0 : i32
    %c0_i32_0 = arith.constant 0 : i32
    %c0_i32_1 = arith.constant 0 : i32
    return %c0_i32, %c0_i32_0 : i32, i32
  }
  func.func @transform_4(%arg0: i32, %arg1: i32) -> (i32, i32) {
    %c0_i32 = arith.constant 0 : i32
    %c0_i32_0 = arith.constant 0 : i32
    %c0_i32_1 = arith.constant 0 : i32
    return %c0_i32, %c0_i32_0 : i32, i32
  }
  func.func @transform_5(%arg0: i32, %arg1: i32) -> (i32, i32, i32) {
    %c0_i32 = arith.constant 0 : i32
    %c0_i32_0 = arith.constant 0 : i32
    return %arg0, %c0_i32, %arg1 : i32, i32, i32
  }
}

</mosaic_0001>

<llo_original>
// kernel: tpu_custom_call.1
$region0: #{tpu_custom_call.1}
  #allocation0 [shape = 'u32[]', space=smem, size = 0x4, offset = 0x4, fixed_abs, tag = 'smem constant byte address 0x4 - core index']
  #allocation1 [shape = 'u32[72,128]{1,0:T(1,128)}', space=vmem, size = 0x9000, scoped, tag = 'internal scratch']
  %s0 = inlined_call_operand.vmem [shape: f32[2,18,18,4], index: 0, kind: input, shape index: {}]
  %s1 = inlined_call_operand.vmem [shape: f32[9,4], index: 1, kind: input, shape index: {}]
  %s2 = inlined_call_operand.vmem [shape: bf16[8,4], index: 2, kind: input, shape index: {}]
  %s3 = inlined_call_operand.vmem [shape: f32[1,4], index: 3, kind: input, shape index: {}]
  %s4 = inlined_call_operand.vmem [shape: f32[8,1], index: 4, kind: input, shape index: {}]
  %s5 = inlined_call_operand.hbm [shape: f32[2,8,256], index: 5, kind: output, shape index: {}]
  %s6 = sld [smem:[#allocation0]]
  $region53: #{tpu_custom_call.1} parent=0
    _
  %s8 = ssub.s32 1, %s6
  %s9 = scalar_select 0, %s8, %s6
  $region1: #{tpu_custom_call.1} parent=0
    #allocation2 [shape = 'u8[8192]{0}', space=vmem, size = 0x2000, scoped, tag = 'output window, operand 0']
    #allocation3 [shape = 's32[2]{0}', space=sflag, size = 0x8, scoped, tag = 'scoped memory for tpu_custom_call.1']
    %10 = vsyncpa [#allocation3], 0
    %s11 = scalar_lea.sflag [#allocation3], 1
    %12 = vsyncpa %s11, 0
    loop: start=0, step=1, limit=6
    $region2: #{tpu_custom_call.1} parent=1 // loop_pre_header
      _
    $region3: #{tpu_custom_call.1} parent=1 // loop_header
      %s14 = sphi 0, %s18
      %p15 = scmp.ge.s32.totalorder %s14, 6
      %s21 = sphi 0, %s33
      %s22 = sphi 0, %s29
      %s23 = sphi 0, %s21
      %s24 = sphi 0, %s22
      %s25 = sphi 0, %s23
      %s26 = sphi 0, %s24
      %s36 = sphi 0, %s38
      %s39 = sphi 0, %s36
      %s40 = sphi 0, %s39
      %s56 = sphi 0, %s40
      %s60 = sphi 0, %s60
      %s62 = sphi 0, %s60
      %s63 = sphi 0, %s62
      %s77 = sphi 0, %s63
      %s81 = sphi 0, %s81
      %s83 = sphi 0, %s81
      %s84 = sphi 0, %s83
      %s98 = sphi 0, %s84
      %s102 = sphi 0, %s102
      %s104 = sphi 0, %s102
      %s105 = sphi 0, %s104
      %s119 = sphi 0, %s105
      %s123 = sphi 0, %s123
      %s125 = sphi 0, %s123
      %s126 = sphi 0, %s125
      %s140 = sphi 0, %s126
      %s148 = sphi 0, %s150
      %s151 = sphi 0, %s148
      %s152 = sphi 0, %s151
      %s168 = sphi 0, %s152
    $region4: #{tpu_custom_call.1} parent=1 // loop_header_branch
      %17 = sbr.rel (%p15) target = $region8
    $region5: #{tpu_custom_call.1} parent=1 // loop_body
      %s19 = ssub.s32 %s14, 1
      %s20 = ssub.s32 %s14, 2
      %s27 = sadd.s32 1, %s22
      %p28 = scmp.ge.s32.totalorder %s27, 2
      %s29 = scalar_select %p28, 0, %s27
      %s30 = sadd.s32 1, %s21
      %s31 = scalar_select %p28, %s30, %s21
      %p32 = scmp.ge.s32.totalorder %s31, 2
      %s33 = scalar_select %p32, 0, %s31
      %s34 = ssub.s32 %s21, %s33
      %p35 = scmp.eq.s32.totalorder %s34, 0
      %s37 = sadd.s32 %s36, 1
      %s38 = scalar_select %p35, %s36, %s37
      %p41 = pneg %p35
      %p42 = scmp.eq.s32.totalorder %s14, 3
      %p43 = por %p41, %p42
      %p44 = scmp.ne.s32.totalorder %s36, %s39
      %p45 = scmp.eq.s32.totalorder %s14, 0
      %p46 = por %p44, %p45
      %p47 = scmp.ne.s32.totalorder %s36, %s39
      %p48 = scmp.eq.s32.totalorder %s19, 3
      %p49 = por %p47, %p48
      %p50 = scmp.ne.s32.totalorder %s39, %s40
      %p51 = scmp.eq.s32.totalorder %s19, 0
      %p52 = por %p50, %p51
      %p53 = scmp.ne.s32.totalorder %s39, %s40
      %p54 = scmp.eq.s32.totalorder %s20, 3
      %p55 = por %p53, %p54
      %p57 = scmp.ne.s32.totalorder %s40, %s56
      %p58 = scmp.eq.s32.totalorder %s20, 0
      %p59 = por %p57, %p58
      %s61 = sadd.s32 %s60, 1
      %p64 = scmp.eq.s32.totalorder %s14, 3
      %p65 = scmp.ne.s32.totalorder %s60, %s62
      %p66 = scmp.eq.s32.totalorder %s14, 0
      %p67 = por %p65, %p66
      %p68 = scmp.ne.s32.totalorder %s60, %s62
      %p69 = scmp.eq.s32.totalorder %s19, 3
      %p70 = por %p68, %p69
      %p71 = scmp.ne.s32.totalorder %s62, %s63
      %p72 = scmp.eq.s32.totalorder %s19, 0
      %p73 = por %p71, %p72
      %p74 = scmp.ne.s32.totalorder %s62, %s63
      %p75 = scmp.eq.s32.totalorder %s20, 3
      %p76 = por %p74, %p75
      %p78 = scmp.ne.s32.totalorder %s63, %s77
      %p79 = scmp.eq.s32.totalorder %s20, 0
      %p80 = por %p78, %p79
      %s82 = sadd.s32 %s81, 1
      %p85 = scmp.eq.s32.totalorder %s14, 3
      %p86 = scmp.ne.s32.totalorder %s81, %s83
      %p87 = scmp.eq.s32.totalorder %s14, 0
      %p88 = por %p86, %p87
      %p89 = scmp.ne.s32.totalorder %s81, %s83
      %p90 = scmp.eq.s32.totalorder %s19, 3
      %p91 = por %p89, %p90
      %p92 = scmp.ne.s32.totalorder %s83, %s84
      %p93 = scmp.eq.s32.totalorder %s19, 0
      %p94 = por %p92, %p93
      %p95 = scmp.ne.s32.totalorder %s83, %s84
      %p96 = scmp.eq.s32.totalorder %s20, 3
      %p97 = por %p95, %p96
      %p99 = scmp.ne.s32.totalorder %s84, %s98
      %p100 = scmp.eq.s32.totalorder %s20, 0
      %p101 = por %p99, %p100
      %s103 = sadd.s32 %s102, 1
      %p106 = scmp.eq.s32.totalorder %s14, 3
      %p107 = scmp.ne.s32.totalorder %s102, %s104
      %p108 = scmp.eq.s32.totalorder %s14, 0
      %p109 = por %p107, %p108
      %p110 = scmp.ne.s32.totalorder %s102, %s104
      %p111 = scmp.eq.s32.totalorder %s19, 3
      %p112 = por %p110, %p111
      %p113 = scmp.ne.s32.totalorder %s104, %s105
      %p114 = scmp.eq.s32.totalorder %s19, 0
      %p115 = por %p113, %p114
      %p116 = scmp.ne.s32.totalorder %s104, %s105
      %p117 = scmp.eq.s32.totalorder %s20, 3
      %p118 = por %p116, %p117
      %p120 = scmp.ne.s32.totalorder %s105, %s119
      %p121 = scmp.eq.s32.totalorder %s20, 0
      %p122 = por %p120, %p121
      %s124 = sadd.s32 %s123, 1
      %p127 = scmp.eq.s32.totalorder %s14, 3
      %p128 = scmp.ne.s32.totalorder %s123, %s125
      %p129 = scmp.eq.s32.totalorder %s14, 0
      %p130 = por %p128, %p129
      %p131 = scmp.ne.s32.totalorder %s123, %s125
      %p132 = scmp.eq.s32.totalorder %s19, 3
      %p133 = por %p131, %p132
      %p134 = scmp.ne.s32.totalorder %s125, %s126
      %p135 = scmp.eq.s32.totalorder %s19, 0
      %p136 = por %p134, %p135
      %p137 = scmp.ne.s32.totalorder %s125, %s126
      %p138 = scmp.eq.s32.totalorder %s20, 3
      %p139 = por %p137, %p138
      %p141 = scmp.ne.s32.totalorder %s126, %s140
      %p142 = scmp.eq.s32.totalorder %s20, 0
      %p143 = por %p141, %p142
      %s144 = ssub.s32 %s21, %s33
      %s145 = ssub.s32 %s22, %s29
      %s146 = sor.u32 %s144, %s145
      %p147 = scmp.eq.s32.totalorder %s146, 0
      %s149 = sadd.s32 %s148, 1
      %s150 = scalar_select %p147, %s148, %s149
      %p153 = pneg %p147
      %p154 = scmp.eq.s32.totalorder %s14, 3
      %p155 = por %p153, %p154
      %p156 = scmp.ne.s32.totalorder %s148, %s151
      %p157 = scmp.eq.s32.totalorder %s14, 0
      %p158 = por %p156, %p157
      %p159 = scmp.ne.s32.totalorder %s148, %s151
      %p160 = scmp.eq.s32.totalorder %s19, 3
      %p161 = por %p159, %p160
      %p162 = scmp.ne.s32.totalorder %s151, %s152
      %p163 = scmp.eq.s32.totalorder %s19, 0
      %p164 = por %p162, %p163
      %p165 = scmp.ne.s32.totalorder %s151, %s152
      %p166 = scmp.eq.s32.totalorder %s20, 3
      %p167 = por %p165, %p166
      %p169 = scmp.ne.s32.totalorder %s152, %s168
      %p170 = scmp.eq.s32.totalorder %s20, 0
      %p171 = por %p169, %p170
      %p172 = scmp.le.s32.totalorder 1, %s14
      %p173 = scmp.lt.s32.totalorder %s14, 5
      %p174 = pnand %p172, %p173
      %p175 = pneg %p174
      // Predicated region
      $region9: #{tpu_custom_call.1} parent=5 // pred_check
        _
      $region10: #{tpu_custom_call.1} parent=5 // pred_check_branch
        %177 = sbr.rel (%p174) target = $region12
      $region11: #{tpu_custom_call.1} parent=5 // pred_region
        %s178 = ssub.s32 %s14, 1
        // Predicated region
        $region13: #{tpu_custom_call.1} parent=11 // pred_check
          %p179 = pneg %p73
        $region14: #{tpu_custom_call.1} parent=11 // pred_check_branch
          %181 = sbr.rel (%p179) target = $region16
        $region15: #{tpu_custom_call.1} parent=11 // pred_region
          _
        $region16: #{tpu_custom_call.1} parent=11 // pred_fallthru
          _
        // Predicated region
        $region17: #{tpu_custom_call.1} parent=11 // pred_check
          %p182 = pneg %p94
        $region18: #{tpu_custom_call.1} parent=11 // pred_check_branch
          %184 = sbr.rel (%p182) target = $region20
        $region19: #{tpu_custom_call.1} parent=11 // pred_region
          _
        $region20: #{tpu_custom_call.1} parent=11 // pred_fallthru
          _
        // Predicated region
        $region21: #{tpu_custom_call.1} parent=11 // pred_check
          %p185 = pneg %p115
        $region22: #{tpu_custom_call.1} parent=11 // pred_check_branch
          %187 = sbr.rel (%p185) target = $region24
        $region23: #{tpu_custom_call.1} parent=11 // pred_region
          _
        $region24: #{tpu_custom_call.1} parent=11 // pred_fallthru
          _
        // Predicated region
        $region25: #{tpu_custom_call.1} parent=11 // pred_check
          %p188 = pneg %p136
        $region26: #{tpu_custom_call.1} parent=11 // pred_check_branch
          %190 = sbr.rel (%p188) target = $region28
        $region27: #{tpu_custom_call.1} parent=11 // pred_region
          _
        $region28: #{tpu_custom_call.1} parent=11 // pred_fallthru
          _
      $region12: #{tpu_custom_call.1} parent=5 // pred_fallthru
        _
      %p191 = scmp.lt.s32.totalorder %s14, 4
      // Predicated region
      $region29: #{tpu_custom_call.1} parent=5 // pred_check
        %p192 = pneg %p191
      $region30: #{tpu_custom_call.1} parent=5 // pred_check_branch
        %194 = sbr.rel (%p192) target = $region32
      $region31: #{tpu_custom_call.1} parent=5 // pred_region
        // Predicated region
        $region33: #{tpu_custom_call.1} parent=31 // pred_check
          %p195 = pneg %p46
        $region34: #{tpu_custom_call.1} parent=31 // pred_check_branch
          %197 = sbr.rel (%p195) target = $region36
        $region35: #{tpu_custom_call.1} parent=31 // pred_region
          %p198 = scmp.lt.s32.totalorder %s21, 1
          %s199 = scalar_select %p198, %s21, 1
          %s200 = smul.addr %s199, 54
          %s201 = smul.addr %s200, 8
          %s202 = scalar_lea.vmem %s0, %s201
        $region36: #{tpu_custom_call.1} parent=31 // pred_fallthru
          _
      $region32: #{tpu_custom_call.1} parent=5 // pred_fallthru
        _
      %p203 = scmp.le.s32.totalorder 1, %s14
      %p204 = scmp.lt.s32.totalorder %s14, 5
      %p205 = pnand %p203, %p204
      %p206 = pneg %p205
      // Predicated region
      $region37: #{tpu_custom_call.1} parent=5 // pred_check
        _
      $region38: #{tpu_custom_call.1} parent=5 // pred_check_branch
        %208 = sbr.rel (%p205) target = $region40
      $region39: #{tpu_custom_call.1} parent=5 // pred_region
        %s209 = ssub.s32 %s14, 1
        %p210 = scmp.lt.s32.totalorder %s23, 1
        %s211 = scalar_select %p210, %s23, 1
        %s212 = smul.addr %s211, 54
        %s213 = smul.addr %s212, 8
        %s214 = scalar_lea.vmem %s0, %s213
        %p215 = pneg %p52
        %p216 = pneg %p49
        %p217 = pneg %p73
        %p218 = pneg %p70
        %p219 = pneg %p94
        %p220 = pneg %p91
        %p221 = pneg %p115
        %p222 = pneg %p112
        %p223 = pneg %p136
        %p224 = pneg %p133
        %p225 = pneg %p164
        %p226 = pneg %p161
        %s227 = sand.u32 %s151, 1
        %s228 = scalar_lea.sflag [#allocation3], %s227
        %s229 = sand.u32 %s151, 1
        %s230 = smul.addr %s229, 8
        %s231 = scalar_lea.vmem [#allocation2], %s230
        %p232 = scmp.lt.s32.totalorder %s23, 1
        %s233 = scalar_select %p232, %s23, 1
        %s234 = smul.addr %s233, 54
        %s235 = smul.addr %s234, 8
        %s236 = scalar_lea.vmem %s0, %s235
        %s237 = smul.u32 %s24, 8
        %s238 = smul.u32 %s237, 24
        %s239 = scalar_lea.vmem %s236, %s238
        %v240 = vld [vmem:[%s239] sm:$0xff]
        %v241 = vld [vmem:[%s239 + $0x8] sm:$0xff]
        %v242 = vld [vmem:[%s239 + $0x18] sm:$0xff]
        %v243 = vld [vmem:[%s239 + $0x20] sm:$0xff]
        %v244 = vld [vmem:[%s239 + $0x30] sm:$0xff]
        %v245 = vld [vmem:[%s239 + $0x38] sm:$0xff]
        %v246 = vld [vmem:[%s239 + $0x48] sm:$0xff]
        %v247 = vld [vmem:[%s239 + $0x50] sm:$0xff]
        %v248 = vld [vmem:[%s239 + $0x60] sm:$0xff]
        %v249 = vld [vmem:[%s239 + $0x68] sm:$0xff]
        %v250 = vld [vmem:[%s239 + $0x78] sm:$0xff]
        %v251 = vld [vmem:[%s239 + $0x80] sm:$0xff]
        %v252 = vld [vmem:[%s239 + $0x90] sm:$0xff]
        %v253 = vld [vmem:[%s239 + $0x98] sm:$0xff]
        %v254 = vld [vmem:[%s239 + $0xa8] sm:$0xff]
        %v255 = vld [vmem:[%s239 + $0xb0] sm:$0xff]
        %v256 = vld [vmem:[%s1] sm:$0x1]
        %v257 = vperm.slane %v256, 0
        %v258 = vmul.f32 %v240, %v257
        %v259 = vmul.f32 %v241, %v257
        %v260 = vmul.f32 %v242, %v257
        %v261 = vmul.f32 %v243, %v257
        %v262 = vmul.f32 %v244, %v257
        %v263 = vmul.f32 %v245, %v257
        %v264 = vmul.f32 %v246, %v257
        %v265 = vmul.f32 %v247, %v257
        %v266 = vmul.f32 %v248, %v257
        %v267 = vmul.f32 %v249, %v257
        %v268 = vmul.f32 %v250, %v257
        %v269 = vmul.f32 %v251, %v257
        %v270 = vmul.f32 %v252, %v257
        %v271 = vmul.f32 %v253, %v257
        %v272 = vmul.f32 %v254, %v257
        %v273 = vmul.f32 %v255, %v257
        %v274 = vld [vmem:[%s239 + $0x1] sm:$0xff]
        %v275 = vld [vmem:[%s239 + $0x9] sm:$0xff]
        %v276 = vld [vmem:[%s239 + $0x19] sm:$0xff]
        %v277 = vld [vmem:[%s239 + $0x21] sm:$0xff]
        %v278 = vld [vmem:[%s239 + $0x31] sm:$0xff]
        %v279 = vld [vmem:[%s239 + $0x39] sm:$0xff]
        %v280 = vld [vmem:[%s239 + $0x49] sm:$0xff]
        %v281 = vld [vmem:[%s239 + $0x51] sm:$0xff]
        %v282 = vld [vmem:[%s239 + $0x61] sm:$0xff]
        %v283 = vld [vmem:[%s239 + $0x69] sm:$0xff]
        %v284 = vld [vmem:[%s239 + $0x79] sm:$0xff]
        %v285 = vld [vmem:[%s239 + $0x81] sm:$0xff]
        %v286 = vld [vmem:[%s239 + $0x91] sm:$0xff]
        %v287 = vld [vmem:[%s239 + $0x99] sm:$0xff]
        %v288 = vld [vmem:[%s239 + $0xa9] sm:$0xff]
        %v289 = vld [vmem:[%s239 + $0xb1] sm:$0xff]
        %v290 = vld [vmem:[%s1 + $0x1] sm:$0x1]
        %v291 = vperm.slane %v290, 0
        %v292 = vmul.f32 %v274, %v291
        %v293 = vmul.f32 %v275, %v291
        %v294 = vmul.f32 %v276, %v291
        %v295 = vmul.f32 %v277, %v291
        %v296 = vmul.f32 %v278, %v291
        %v297 = vmul.f32 %v279, %v291
        %v298 = vmul.f32 %v280, %v291
        %v299 = vmul.f32 %v281, %v291
        %v300 = vmul.f32 %v282, %v291
        %v301 = vmul.f32 %v283, %v291
        %v302 = vmul.f32 %v284, %v291
        %v303 = vmul.f32 %v285, %v291
        %v304 = vmul.f32 %v286, %v291
        %v305 = vmul.f32 %v287, %v291
        %v306 = vmul.f32 %v288, %v291
        %v307 = vmul.f32 %v289, %v291
        %v308 = vadd.f32 %v258, %v292
        %v309 = vadd.f32 %v259, %v293
        %v310 = vadd.f32 %v260, %v294
        %v311 = vadd.f32 %v261, %v295
        %v312 = vadd.f32 %v262, %v296
        %v313 = vadd.f32 %v263, %v297
        %v314 = vadd.f32 %v264, %v298
        %v315 = vadd.f32 %v265, %v299
        %v316 = vadd.f32 %v266, %v300
        %v317 = vadd.f32 %v267, %v301
        %v318 = vadd.f32 %v268, %v302
        %v319 = vadd.f32 %v269, %v303
        %v320 = vadd.f32 %v270, %v304
        %v321 = vadd.f32 %v271, %v305
        %v322 = vadd.f32 %v272, %v306
        %v323 = vadd.f32 %v273, %v307
        %v324 = vld [vmem:[%s239 + $0x2] sm:$0xff]
        %v325 = vld [vmem:[%s239 + $0xa] sm:$0xff]
        %v326 = vld [vmem:[%s239 + $0x1a] sm:$0xff]
        %v327 = vld [vmem:[%s239 + $0x22] sm:$0xff]
        %v328 = vld [vmem:[%s239 + $0x32] sm:$0xff]
        %v329 = vld [vmem:[%s239 + $0x3a] sm:$0xff]
        %v330 = vld [vmem:[%s239 + $0x4a] sm:$0xff]
        %v331 = vld [vmem:[%s239 + $0x52] sm:$0xff]
        %v332 = vld [vmem:[%s239 + $0x62] sm:$0xff]
        %v333 = vld [vmem:[%s239 + $0x6a] sm:$0xff]
        %v334 = vld [vmem:[%s239 + $0x7a] sm:$0xff]
        %v335 = vld [vmem:[%s239 + $0x82] sm:$0xff]
        %v336 = vld [vmem:[%s239 + $0x92] sm:$0xff]
        %v337 = vld [vmem:[%s239 + $0x9a] sm:$0xff]
        %v338 = vld [vmem:[%s239 + $0xaa] sm:$0xff]
        %v339 = vld [vmem:[%s239 + $0xb2] sm:$0xff]
        %v340 = vld [vmem:[%s1 + $0x2] sm:$0x1]
        %v341 = vperm.slane %v340, 0
        %v342 = vmul.f32 %v324, %v341
        %v343 = vmul.f32 %v325, %v341
        %v344 = vmul.f32 %v326, %v341
        %v345 = vmul.f32 %v327, %v341
        %v346 = vmul.f32 %v328, %v341
        %v347 = vmul.f32 %v329, %v341
        %v348 = vmul.f32 %v330, %v341
        %v349 = vmul.f32 %v331, %v341
        %v350 = vmul.f32 %v332, %v341
        %v351 = vmul.f32 %v333, %v341
        %v352 = vmul.f32 %v334, %v341
        %v353 = vmul.f32 %v335, %v341
        %v354 = vmul.f32 %v336, %v341
        %v355 = vmul.f32 %v337, %v341
        %v356 = vmul.f32 %v338, %v341
        %v357 = vmul.f32 %v339, %v341
        %v358 = vadd.f32 %v308, %v342
        %v359 = vadd.f32 %v309, %v343
        %v360 = vadd.f32 %v310, %v344
        %v361 = vadd.f32 %v311, %v345
        %v362 = vadd.f32 %v312, %v346
        %v363 = vadd.f32 %v313, %v347
        %v364 = vadd.f32 %v314, %v348
        %v365 = vadd.f32 %v315, %v349
        %v366 = vadd.f32 %v316, %v350
        %v367 = vadd.f32 %v317, %v351
        %v368 = vadd.f32 %v318, %v352
        %v369 = vadd.f32 %v319, %v353
        %v370 = vadd.f32 %v320, %v354
        %v371 = vadd.f32 %v321, %v355
        %v372 = vadd.f32 %v322, %v356
        %v373 = vadd.f32 %v323, %v357
        %s374 = sadd.s32 %s237, 1
        %s375 = smul.u32 %s374, 24
        %s376 = scalar_lea.vmem %s236, %s375
        %v377 = vld [vmem:[%s376] sm:$0xff]
        %v378 = vld [vmem:[%s376 + $0x8] sm:$0xff]
        %v379 = vld [vmem:[%s376 + $0x18] sm:$0xff]
        %v380 = vld [vmem:[%s376 + $0x20] sm:$0xff]
        %v381 = vld [vmem:[%s376 + $0x30] sm:$0xff]
        %v382 = vld [vmem:[%s376 + $0x38] sm:$0xff]
        %v383 = vld [vmem:[%s376 + $0x48] sm:$0xff]
        %v384 = vld [vmem:[%s376 + $0x50] sm:$0xff]
        %v385 = vld [vmem:[%s376 + $0x60] sm:$0xff]
        %v386 = vld [vmem:[%s376 + $0x68] sm:$0xff]
        %v387 = vld [vmem:[%s376 + $0x78] sm:$0xff]
        %v388 = vld [vmem:[%s376 + $0x80] sm:$0xff]
        %v389 = vld [vmem:[%s376 + $0x90] sm:$0xff]
        %v390 = vld [vmem:[%s376 + $0x98] sm:$0xff]
        %v391 = vld [vmem:[%s376 + $0xa8] sm:$0xff]
        %v392 = vld [vmem:[%s376 + $0xb0] sm:$0xff]
        %v393 = vld [vmem:[%s1 + $0x3] sm:$0x1]
        %v394 = vperm.slane %v393, 0
        %v395 = vmul.f32 %v377, %v394
        %v396 = vmul.f32 %v378, %v394
        %v397 = vmul.f32 %v379, %v394
        %v398 = vmul.f32 %v380, %v394
        %v399 = vmul.f32 %v381, %v394
        %v400 = vmul.f32 %v382, %v394
        %v401 = vmul.f32 %v383, %v394
        %v402 = vmul.f32 %v384, %v394
        %v403 = vmul.f32 %v385, %v394
        %v404 = vmul.f32 %v386, %v394
        %v405 = vmul.f32 %v387, %v394
        %v406 = vmul.f32 %v388, %v394
        %v407 = vmul.f32 %v389, %v394
        %v408 = vmul.f32 %v390, %v394
        %v409 = vmul.f32 %v391, %v394
        %v410 = vmul.f32 %v392, %v394
        %v411 = vadd.f32 %v358, %v395
        %v412 = vadd.f32 %v359, %v396
        %v413 = vadd.f32 %v360, %v397
        %v414 = vadd.f32 %v361, %v398
        %v415 = vadd.f32 %v362, %v399
        %v416 = vadd.f32 %v363, %v400
        %v417 = vadd.f32 %v364, %v401
        %v418 = vadd.f32 %v365, %v402
        %v419 = vadd.f32 %v366, %v403
        %v420 = vadd.f32 %v367, %v404
        %v421 = vadd.f32 %v368, %v405
        %v422 = vadd.f32 %v369, %v406
        %v423 = vadd.f32 %v370, %v407
        %v424 = vadd.f32 %v371, %v408
        %v425 = vadd.f32 %v372, %v409
        %v426 = vadd.f32 %v373, %v410
        %v427 = vld [vmem:[%s376 + $0x1] sm:$0xff]
        %v428 = vld [vmem:[%s376 + $0x9] sm:$0xff]
        %v429 = vld [vmem:[%s376 + $0x19] sm:$0xff]
        %v430 = vld [vmem:[%s376 + $0x21] sm:$0xff]
        %v431 = vld [vmem:[%s376 + $0x31] sm:$0xff]
        %v432 = vld [vmem:[%s376 + $0x39] sm:$0xff]
        %v433 = vld [vmem:[%s376 + $0x49] sm:$0xff]
        %v434 = vld [vmem:[%s376 + $0x51] sm:$0xff]
        %v435 = vld [vmem:[%s376 + $0x61] sm:$0xff]
        %v436 = vld [vmem:[%s376 + $0x69] sm:$0xff]
        %v437 = vld [vmem:[%s376 + $0x79] sm:$0xff]
        %v438 = vld [vmem:[%s376 + $0x81] sm:$0xff]
        %v439 = vld [vmem:[%s376 + $0x91] sm:$0xff]
        %v440 = vld [vmem:[%s376 + $0x99] sm:$0xff]
        %v441 = vld [vmem:[%s376 + $0xa9] sm:$0xff]
        %v442 = vld [vmem:[%s376 + $0xb1] sm:$0xff]
        %v443 = vld [vmem:[%s1 + $0x4] sm:$0x1]
        %v444 = vperm.slane %v443, 0
        %v445 = vmul.f32 %v427, %v444
        %v446 = vmul.f32 %v428, %v444
        %v447 = vmul.f32 %v429, %v444
        %v448 = vmul.f32 %v430, %v444
        %v449 = vmul.f32 %v431, %v444
        %v450 = vmul.f32 %v432, %v444
        %v451 = vmul.f32 %v433, %v444
        %v452 = vmul.f32 %v434, %v444
        %v453 = vmul.f32 %v435, %v444
        %v454 = vmul.f32 %v436, %v444
        %v455 = vmul.f32 %v437, %v444
        %v456 = vmul.f32 %v438, %v444
        %v457 = vmul.f32 %v439, %v444
        %v458 = vmul.f32 %v440, %v444
        %v459 = vmul.f32 %v441, %v444
        %v460 = vmul.f32 %v442, %v444
        %v461 = vadd.f32 %v411, %v445
        %v462 = vadd.f32 %v412, %v446
        %v463 = vadd.f32 %v413, %v447
        %v464 = vadd.f32 %v414, %v448
        %v465 = vadd.f32 %v415, %v449
        %v466 = vadd.f32 %v416, %v450
        %v467 = vadd.f32 %v417, %v451
        %v468 = vadd.f32 %v418, %v452
        %v469 = vadd.f32 %v419, %v453
        %v470 = vadd.f32 %v420, %v454
        %v471 = vadd.f32 %v421, %v455
        %v472 = vadd.f32 %v422, %v456
        %v473 = vadd.f32 %v423, %v457
        %v474 = vadd.f32 %v424, %v458
        %v475 = vadd.f32 %v425, %v459
        %v476 = vadd.f32 %v426, %v460
        %v477 = vld [vmem:[%s376 + $0x2] sm:$0xff]
        %v478 = vld [vmem:[%s376 + $0xa] sm:$0xff]
        %v479 = vld [vmem:[%s376 + $0x1a] sm:$0xff]
        %v480 = vld [vmem:[%s376 + $0x22] sm:$0xff]
        %v481 = vld [vmem:[%s376 + $0x32] sm:$0xff]
        %v482 = vld [vmem:[%s376 + $0x3a] sm:$0xff]
        %v483 = vld [vmem:[%s376 + $0x4a] sm:$0xff]
        %v484 = vld [vmem:[%s376 + $0x52] sm:$0xff]
        %v485 = vld [vmem:[%s376 + $0x62] sm:$0xff]
        %v486 = vld [vmem:[%s376 + $0x6a] sm:$0xff]
        %v487 = vld [vmem:[%s376 + $0x7a] sm:$0xff]
        %v488 = vld [vmem:[%s376 + $0x82] sm:$0xff]
        %v489 = vld [vmem:[%s376 + $0x92] sm:$0xff]
        %v490 = vld [vmem:[%s376 + $0x9a] sm:$0xff]
        %v491 = vld [vmem:[%s376 + $0xaa] sm:$0xff]
        %v492 = vld [vmem:[%s376 + $0xb2] sm:$0xff]
        %v493 = vld [vmem:[%s1 + $0x5] sm:$0x1]
        %v494 = vperm.slane %v493, 0
        %v495 = vmul.f32 %v477, %v494
        %v496 = vmul.f32 %v478, %v494
        %v497 = vmul.f32 %v479, %v494
        %v498 = vmul.f32 %v480, %v494
        %v499 = vmul.f32 %v481, %v494
        %v500 = vmul.f32 %v482, %v494
        %v501 = vmul.f32 %v483, %v494
        %v502 = vmul.f32 %v484, %v494
        %v503 = vmul.f32 %v485, %v494
        %v504 = vmul.f32 %v486, %v494
        %v505 = vmul.f32 %v487, %v494
        %v506 = vmul.f32 %v488, %v494
        %v507 = vmul.f32 %v489, %v494
        %v508 = vmul.f32 %v490, %v494
        %v509 = vmul.f32 %v491, %v494
        %v510 = vmul.f32 %v492, %v494
        %v511 = vadd.f32 %v461, %v495
        %v512 = vadd.f32 %v462, %v496
        %v513 = vadd.f32 %v463, %v497
        %v514 = vadd.f32 %v464, %v498
        %v515 = vadd.f32 %v465, %v499
        %v516 = vadd.f32 %v466, %v500
        %v517 = vadd.f32 %v467, %v501
        %v518 = vadd.f32 %v468, %v502
        %v519 = vadd.f32 %v469, %v503
        %v520 = vadd.f32 %v470, %v504
        %v521 = vadd.f32 %v471, %v505
        %v522 = vadd.f32 %v472, %v506
        %v523 = vadd.f32 %v473, %v507
        %v524 = vadd.f32 %v474, %v508
        %v525 = vadd.f32 %v475, %v509
        %v526 = vadd.f32 %v476, %v510
        %s527 = sadd.s32 %s237, 2
        %s528 = smul.u32 %s527, 24
        %s529 = scalar_lea.vmem %s236, %s528
        %v530 = vld [vmem:[%s529] sm:$0xff]
        %v531 = vld [vmem:[%s529 + $0x8] sm:$0xff]
        %v532 = vld [vmem:[%s529 + $0x18] sm:$0xff]
        %v533 = vld [vmem:[%s529 + $0x20] sm:$0xff]
        %v534 = vld [vmem:[%s529 + $0x30] sm:$0xff]
        %v535 = vld [vmem:[%s529 + $0x38] sm:$0xff]
        %v536 = vld [vmem:[%s529 + $0x48] sm:$0xff]
        %v537 = vld [vmem:[%s529 + $0x50] sm:$0xff]
        %v538 = vld [vmem:[%s529 + $0x60] sm:$0xff]
        %v539 = vld [vmem:[%s529 + $0x68] sm:$0xff]
        %v540 = vld [vmem:[%s529 + $0x78] sm:$0xff]
        %v541 = vld [vmem:[%s529 + $0x80] sm:$0xff]
        %v542 = vld [vmem:[%s529 + $0x90] sm:$0xff]
        %v543 = vld [vmem:[%s529 + $0x98] sm:$0xff]
        %v544 = vld [vmem:[%s529 + $0xa8] sm:$0xff]
        %v545 = vld [vmem:[%s529 + $0xb0] sm:$0xff]
        %v546 = vld [vmem:[%s1 + $0x6] sm:$0x1]
        %v547 = vperm.slane %v546, 0
        %v548 = vmul.f32 %v530, %v547
        %v549 = vmul.f32 %v531, %v547
        %v550 = vmul.f32 %v532, %v547
        %v551 = vmul.f32 %v533, %v547
        %v552 = vmul.f32 %v534, %v547
        %v553 = vmul.f32 %v535, %v547
        %v554 = vmul.f32 %v536, %v547
        %v555 = vmul.f32 %v537, %v547
        %v556 = vmul.f32 %v538, %v547
        %v557 = vmul.f32 %v539, %v547
        %v558 = vmul.f32 %v540, %v547
        %v559 = vmul.f32 %v541, %v547
        %v560 = vmul.f32 %v542, %v547
        %v561 = vmul.f32 %v543, %v547
        %v562 = vmul.f32 %v544, %v547
        %v563 = vmul.f32 %v545, %v547
        %v564 = vadd.f32 %v511, %v548
        %v565 = vadd.f32 %v512, %v549
        %v566 = vadd.f32 %v513, %v550
        %v567 = vadd.f32 %v514, %v551
        %v568 = vadd.f32 %v515, %v552
        %v569 = vadd.f32 %v516, %v553
        %v570 = vadd.f32 %v517, %v554
        %v571 = vadd.f32 %v518, %v555
        %v572 = vadd.f32 %v519, %v556
        %v573 = vadd.f32 %v520, %v557
        %v574 = vadd.f32 %v521, %v558
        %v575 = vadd.f32 %v522, %v559
        %v576 = vadd.f32 %v523, %v560
        %v577 = vadd.f32 %v524, %v561
        %v578 = vadd.f32 %v525, %v562
        %v579 = vadd.f32 %v526, %v563
        %v580 = vld [vmem:[%s529 + $0x1] sm:$0xff]
        %v581 = vld [vmem:[%s529 + $0x9] sm:$0xff]
        %v582 = vld [vmem:[%s529 + $0x19] sm:$0xff]
        %v583 = vld [vmem:[%s529 + $0x21] sm:$0xff]
        %v584 = vld [vmem:[%s529 + $0x31] sm:$0xff]
        %v585 = vld [vmem:[%s529 + $0x39] sm:$0xff]
        %v586 = vld [vmem:[%s529 + $0x49] sm:$0xff]
        %v587 = vld [vmem:[%s529 + $0x51] sm:$0xff]
        %v588 = vld [vmem:[%s529 + $0x61] sm:$0xff]
        %v589 = vld [vmem:[%s529 + $0x69] sm:$0xff]
        %v590 = vld [vmem:[%s529 + $0x79] sm:$0xff]
        %v591 = vld [vmem:[%s529 + $0x81] sm:$0xff]
        %v592 = vld [vmem:[%s529 + $0x91] sm:$0xff]
        %v593 = vld [vmem:[%s529 + $0x99] sm:$0xff]
        %v594 = vld [vmem:[%s529 + $0xa9] sm:$0xff]
        %v595 = vld [vmem:[%s529 + $0xb1] sm:$0xff]
        %v596 = vld [vmem:[%s1 + $0x7] sm:$0x1]
        %v597 = vperm.slane %v596, 0
        %v598 = vmul.f32 %v580, %v597
        %v599 = vmul.f32 %v581, %v597
        %v600 = vmul.f32 %v582, %v597
        %v601 = vmul.f32 %v583, %v597
        %v602 = vmul.f32 %v584, %v597
        %v603 = vmul.f32 %v585, %v597
        %v604 = vmul.f32 %v586, %v597
        %v605 = vmul.f32 %v587, %v597
        %v606 = vmul.f32 %v588, %v597
        %v607 = vmul.f32 %v589, %v597
        %v608 = vmul.f32 %v590, %v597
        %v609 = vmul.f32 %v591, %v597
        %v610 = vmul.f32 %v592, %v597
        %v611 = vmul.f32 %v593, %v597
        %v612 = vmul.f32 %v594, %v597
        %v613 = vmul.f32 %v595, %v597
        %v614 = vadd.f32 %v564, %v598
        %v615 = vadd.f32 %v565, %v599
        %v616 = vadd.f32 %v566, %v600
        %v617 = vadd.f32 %v567, %v601
        %v618 = vadd.f32 %v568, %v602
        %v619 = vadd.f32 %v569, %v603
        %v620 = vadd.f32 %v570, %v604
        %v621 = vadd.f32 %v571, %v605
        %v622 = vadd.f32 %v572, %v606
        %v623 = vadd.f32 %v573, %v607
        %v624 = vadd.f32 %v574, %v608
        %v625 = vadd.f32 %v575, %v609
        %v626 = vadd.f32 %v576, %v610
        %v627 = vadd.f32 %v577, %v611
        %v628 = vadd.f32 %v578, %v612
        %v629 = vadd.f32 %v579, %v613
        %v630 = vld [vmem:[%s529 + $0x2] sm:$0xff]
        %v631 = vld [vmem:[%s529 + $0xa] sm:$0xff]
        %v632 = vld [vmem:[%s529 + $0x1a] sm:$0xff]
        %v633 = vld [vmem:[%s529 + $0x22] sm:$0xff]
        %v634 = vld [vmem:[%s529 + $0x32] sm:$0xff]
        %v635 = vld [vmem:[%s529 + $0x3a] sm:$0xff]
        %v636 = vld [vmem:[%s529 + $0x4a] sm:$0xff]
        %v637 = vld [vmem:[%s529 + $0x52] sm:$0xff]
        %v638 = vld [vmem:[%s529 + $0x62] sm:$0xff]
        %v639 = vld [vmem:[%s529 + $0x6a] sm:$0xff]
        %v640 = vld [vmem:[%s529 + $0x7a] sm:$0xff]
        %v641 = vld [vmem:[%s529 + $0x82] sm:$0xff]
        %v642 = vld [vmem:[%s529 + $0x92] sm:$0xff]
        %v643 = vld [vmem:[%s529 + $0x9a] sm:$0xff]
        %v644 = vld [vmem:[%s529 + $0xaa] sm:$0xff]
        %v645 = vld [vmem:[%s529 + $0xb2] sm:$0xff]
        %v646 = vld [vmem:[%s1 + $0x8] sm:$0x1]
        %v647 = vperm.slane %v646, 0
        %v648 = vmul.f32 %v630, %v647
        %v649 = vmul.f32 %v631, %v647
        %v650 = vmul.f32 %v632, %v647
        %v651 = vmul.f32 %v633, %v647
        %v652 = vmul.f32 %v634, %v647
        %v653 = vmul.f32 %v635, %v647
        %v654 = vmul.f32 %v636, %v647
        %v655 = vmul.f32 %v637, %v647
        %v656 = vmul.f32 %v638, %v647
        %v657 = vmul.f32 %v639, %v647
        %v658 = vmul.f32 %v640, %v647
        %v659 = vmul.f32 %v641, %v647
        %v660 = vmul.f32 %v642, %v647
        %v661 = vmul.f32 %v643, %v647
        %v662 = vmul.f32 %v644, %v647
        %v663 = vmul.f32 %v645, %v647
        %v664 = vadd.f32 %v614, %v648
        %v665 = vadd.f32 %v615, %v649
        %v666 = vadd.f32 %v616, %v650
        %v667 = vadd.f32 %v617, %v651
        %v668 = vadd.f32 %v618, %v652
        %v669 = vadd.f32 %v619, %v653
        %v670 = vadd.f32 %v620, %v654
        %v671 = vadd.f32 %v621, %v655
        %v672 = vadd.f32 %v622, %v656
        %v673 = vadd.f32 %v623, %v657
        %v674 = vadd.f32 %v624, %v658
        %v675 = vadd.f32 %v625, %v659
        %v676 = vadd.f32 %v626, %v660
        %v677 = vadd.f32 %v627, %v661
        %v678 = vadd.f32 %v628, %v662
        %v679 = vadd.f32 %v629, %v663
        %v680 = vld [vmem:[%s3] sm:$0x1]
        %v682 = vperm.slane %v680, 0
        %v684 = vadd.f32 %v664, %v682
        %v685 = vadd.f32 %v665, %v682
        %v686 = vadd.f32 %v666, %v682
        %v687 = vadd.f32 %v667, %v682
        %v688 = vadd.f32 %v668, %v682
        %v689 = vadd.f32 %v669, %v682
        %v690 = vadd.f32 %v670, %v682
        %v691 = vadd.f32 %v671, %v682
        %v692 = vadd.f32 %v672, %v682
        %v693 = vadd.f32 %v673, %v682
        %v694 = vadd.f32 %v674, %v682
        %v695 = vadd.f32 %v675, %v682
        %v696 = vadd.f32 %v676, %v682
        %v697 = vadd.f32 %v677, %v682
        %v698 = vadd.f32 %v678, %v682
        %v699 = vadd.f32 %v679, %v682
        %v700 = vmax.f32 %v684, 0.0
        %v701 = vmax.f32 %v685, 0.0
        %v702 = vmax.f32 %v686, 0.0
        %v703 = vmax.f32 %v687, 0.0
        %v704 = vmax.f32 %v688, 0.0
        %v705 = vmax.f32 %v689, 0.0
        %v706 = vmax.f32 %v690, 0.0
        %v707 = vmax.f32 %v691, 0.0
        %v708 = vmax.f32 %v692, 0.0
        %v709 = vmax.f32 %v693, 0.0
        %v710 = vmax.f32 %v694, 0.0
        %v711 = vmax.f32 %v695, 0.0
        %v712 = vmax.f32 %v696, 0.0
        %v713 = vmax.f32 %v697, 0.0
        %v714 = vmax.f32 %v698, 0.0
        %v715 = vmax.f32 %v699, 0.0
        %v716 = vpack.c.bf16 %v701, %v700
        %v717 = vpack.c.bf16 %v703, %v702
        %v718 = vpack.c.bf16 %v705, %v704
        %v719 = vpack.c.bf16 %v707, %v706
        %v720 = vpack.c.bf16 %v709, %v708
        %v721 = vpack.c.bf16 %v711, %v710
        %v722 = vpack.c.bf16 %v713, %v712
        %v723 = vpack.c.bf16 %v715, %v714
        %v724 = vld [vmem:[%s2] sm:$0xf]
        %v725 = vld [vmem:[%s4] sm:$0xff]
        %727 = vset.pattern.permute.xlu0 0
        %728 = vperm.xlu0 %727, %v725
        %v729 = vpop.permute.xlu0 %728
        %vm731 = vcmask 31744
        %v733 = vsel %vm731, %v724, 0
        %v736 = vsel %vm731, %v716, 0
        %v739 = vsel %vm731, %v717, 0
        %v742 = vsel %vm731, %v718, 0
        %v745 = vsel %vm731, %v719, 0
        %v748 = vsel %vm731, %v720, 0
        %v751 = vsel %vm731, %v721, 0
        %v754 = vsel %vm731, %v722, 0
        %v757 = vsel %vm731, %v723, 0
        %759 = vmatpush.bf16.xpose.msra.mxu0 %v757
        %760 = vmatpush.bf16.xpose.msra.mxu0 %v754
        %761 = vmatpush.bf16.xpose.msra.mxu0 %v751
        %762 = vmatpush.bf16.xpose.msra.mxu0 %v748
        %763 = vmatpush.bf16.xpose.msra.mxu0 %v745
        %764 = vmatpush.bf16.xpose.msra.mxu0 %v742
        %765 = vmatpush.bf16.xpose.msra.mxu0 %v739
        %766 = vmatpush.bf16.xpose.msra.mxu0 %v736
        %767 = vmatmul.bf16.gmra.mxu0 %v733
        %v768 = vpop.f32.mrf.mxu0
        %v769 = vadd.f32 %v729, %v768
        %v770 = vpop.f32.mrf.mxu0
        %771 = vdwg.mxu0
        %v772 = vmax.f32 %v769, 0.0
        %773 = vst [vmem:[%s231] sm:$0xff] %v772
        %s774 = sand.u32 %s151, 1
        %s775 = scalar_lea.sflag [#allocation3], %s774
        %s776 = sand.u32 %s151, 1
        %s777 = smul.addr %s776, 8
        %s778 = scalar_lea.vmem [#allocation2], %s777
        // Predicated region
        $region41: #{tpu_custom_call.1} parent=39 // pred_check
          %p779 = pneg %p161
        $region42: #{tpu_custom_call.1} parent=39 // pred_check_branch
          %781 = sbr.rel (%p779) target = $region44
        $region43: #{tpu_custom_call.1} parent=39 // pred_region
          %783 = vsyncadd %s775, 0
          %s784 = smul.addr %s23, 2
          %s785 = sadd.s32 %s24, %s784
          %s786 = smul.addr %s785, 8
          %s787 = scalar_lea.hbm %s5, %s786
          %s789 = sshll.u32 %s778, 4
          %s790 = int_to_ptr.vmem [resolvable:$true] %s789
          %s791 = sshll.u32 %s787, 4
          %s792 = int_to_ptr.hbm [resolvable:$true] %s791
          %794 = dma.vmem_to_hbm [thread:$0]  %s790, 128, %s792, %s775
        $region44: #{tpu_custom_call.1} parent=39 // pred_fallthru
          _
      $region40: #{tpu_custom_call.1} parent=5 // pred_fallthru
        _
      %p795 = scmp.le.s32.totalorder 2, %s14
      // Predicated region
      $region45: #{tpu_custom_call.1} parent=5 // pred_check
        %p796 = pneg %p795
      $region46: #{tpu_custom_call.1} parent=5 // pred_check_branch
        %798 = sbr.rel (%p796) target = $region48
      $region47: #{tpu_custom_call.1} parent=5 // pred_region
        %s799 = ssub.s32 %s14, 2
        // Predicated region
        $region49: #{tpu_custom_call.1} parent=47 // pred_check
          %p800 = pneg %p167
        $region50: #{tpu_custom_call.1} parent=47 // pred_check_branch
          %802 = sbr.rel (%p800) target = $region52
        $region51: #{tpu_custom_call.1} parent=47 // pred_region
          %s803 = sand.u32 %s152, 1
          %s804 = scalar_lea.sflag [#allocation3], %s803
          %s805 = sand.u32 %s152, 1
          %s806 = smul.addr %s805, 8
          %s807 = scalar_lea.vmem [#allocation2], %s806
          %809 = dma.done %s804, 128
        $region52: #{tpu_custom_call.1} parent=47 // pred_fallthru
          _
      $region48: #{tpu_custom_call.1} parent=5 // pred_fallthru
        _
    $region6: #{tpu_custom_call.1} parent=1 // loop_footer
      %s18 = sadd.s32 1, %s14
    $region7: #{tpu_custom_call.1} parent=1 // loop_footer_branch
      %13 = sbr.rel target = $region3
    $region8: #{tpu_custom_call.1} parent=1 // loop_exit
      _
    %810 = vsyncpa [#allocation3], 1
    %s811 = scalar_lea.sflag [#allocation3], 1
    %812 = vsyncpa %s811, 1

</llo_original>
